<compile_context>
chip_gen: v5e
topology: v5e:2x2
jax: 0.10.0
libtpu: 0.0.40
codegen_flags: <defaults>
</compile_context>

<pallas_src>
import jax
import jax.numpy as jnp
from jax.experimental import pallas as pl
from jax.experimental.pallas import tpu as pltpu

MARGIN = 0.25
EPS = 1e-5

# ~2 MiB per f32 input tile -> 4 inputs x 2 pipeline buffers ~= 16 MiB of VMEM,
# comfortably inside the scoped budget on v5e (16 MiB default raised below),
# v6e (32 MiB) and v7x (32 MiB scoped / 64 MiB physical).
_TILE_ELEMS = 512 * 1024
_VMEM_LIMIT_BYTES = 32 * 1024 * 1024


def _choose_batch_tile(batch: int, hidden: int) -> int:
    """Pick a batch-tile size: multiple of 8 (or the full batch if < 8)."""
    if batch <= 8:
        return batch
    max_rows = max(8, (_TILE_ELEMS // max(hidden, 1)) // 8 * 8)
    bt = min(max_rows, (batch // 8) * 8)
    return max(8, bt)


def _make_kernel(total_batch: int, margin: float, eps: float):
    def kernel(p1_ref, p2_ref, n1_ref, n2_ref, partial_ref):
        p1 = p1_ref[...]
        p2 = p2_ref[...]
        n1 = n1_ref[...]
        n2 = n2_ref[...]

        def rsum(x, y):
            # row-wise inner product over the hidden (lane) axis -> (Bt, 1)
            return jnp.sum(x * y, axis=-1, keepdims=True)

        # 7 unique reductions (no duplicated self-norms).
        p1p1 = rsum(p1, p1)
        p2p2 = rsum(p2, p2)
        n1n1 = rsum(n1, n1)
        n2n2 = rsum(n2, n2)
        p1p2 = rsum(p1, p2)
        p1n2 = rsum(p1, n2)
        p2n1 = rsum(p2, n1)

        m_p1 = jnp.sqrt(p1p1)
        m_p2 = jnp.sqrt(p2p2)
        m_n1 = jnp.sqrt(n1n1)
        m_n2 = jnp.sqrt(n2n2)

        # Divide on the EUP (exact reciprocal; approx would risk the 1e-5 tol).
        sim_p = p1p2 * pl.reciprocal(m_p1 * m_p2 + eps)
        sim_n1 = p1n2 * pl.reciprocal(m_p1 * m_n2 + eps)
        sim_n2 = p2n1 * pl.reciprocal(m_p2 * m_n1 + eps)

        # mask * sim_n1 + (1 - mask) * sim_n2 == maximum for finite inputs.
        sim_n = jnp.maximum(sim_n1, sim_n2)
        hinge = jnp.maximum(sim_n - sim_p + margin, 0.0)  # (Bt, 1)

        # Mask rows past the true batch (ragged last tile).
        bt = hinge.shape[0]
        row = pl.program_id(0) * bt + jax.lax.broadcasted_iota(
            jnp.int32, hinge.shape, 0
        )
        hinge = jnp.where(row < total_batch, hinge, 0.0)

        # Per-tile partial sum -> (1, 1) output block for this grid step.
        partial_ref[...] = jnp.sum(hinge, axis=0, keepdims=True)

    return kernel


def triplet_margin_loss_multi_prev(pos1, pos2, neg1, neg2,
                                   margin=MARGIN, eps=EPS):
    """pos1/pos2/neg1/neg2: (batch, hidden) float32 -> scalar float32."""
    B, H = pos1.shape
    bt = _choose_batch_tile(B, H)
    num_tiles = pl.cdiv(B, bt)

    in_spec = pl.BlockSpec((bt, H), lambda i: (i, 0))
    out_spec = pl.BlockSpec((1, 1), lambda i: (i, 0))

    partials = pl.pallas_call(
        _make_kernel(B, margin, eps),
        out_shape=jax.ShapeDtypeStruct((num_tiles, 1), jnp.float32),
        grid=(num_tiles,),
        in_specs=[in_spec, in_spec, in_spec, in_spec],
        out_specs=out_spec,
        compiler_params=pltpu.CompilerParams(
            dimension_semantics=("parallel",),
            vmem_limit_bytes=_VMEM_LIMIT_BYTES,
        ),
    )(pos1, pos2, neg1, neg2)

    # Final reduction + mean over the FULL batch (done once, in the wrapper).
    return jnp.sum(partials) / B


def _reference(pos1, pos2, neg1, neg2, margin=MARGIN, eps=EPS):
    def cos(x, y):
        dot = jnp.sum(x * y, axis=-1)
        mx = jnp.sqrt(jnp.sum(x * x, axis=-1))
        my = jnp.sqrt(jnp.sum(y * y, axis=-1))
        return dot / (mx * my + eps)

    sim_p = cos(pos1, pos2)
    sim_n1 = cos(pos1, neg2)
    sim_n2 = cos(pos2, neg1)
    mask = (sim_n1 > sim_n2).astype(jnp.float32)
    sim_n = mask * sim_n1 + (1.0 - mask) * sim_n2
    return jnp.mean(jnp.maximum(sim_n - sim_p + margin, 0.0))


if __name__ == "__main__":
    key = jax.random.PRNGKey(0)

    # Case 1: small, single-tile (batch=8, hidden=32).
    k1, k2, k3, k4, key = jax.random.split(key, 5)
    pos1 = jax.random.normal(k1, (8, 32), dtype=jnp.float32)
    pos2 = jax.random.normal(k2, (8, 32), dtype=jnp.float32)
    neg1 = jax.random.normal(k3, (8, 32), dtype=jnp.float32)
    neg2 = jax.random.normal(k4, (8, 32), dtype=jnp.float32)
    loss = triplet_margin_loss_multi_prev(pos1, pos2, neg1, neg2)
    jax.block_until_ready(loss)
    ref = _reference(pos1, pos2, neg1, neg2)
    assert jnp.allclose(loss, ref, atol=1e-5, rtol=1e-5), (loss, ref)

    # Case 2: multi-tile grid with a ragged last tile (batch=13, hidden=128).
    k1, k2, k3, k4, key = jax.random.split(key, 5)
    pos1 = jax.random.normal(k1, (13, 128), dtype=jnp.float32)
    pos2 = jax.random.normal(k2, (13, 128), dtype=jnp.float32)
    neg1 = jax.random.normal(k3, (13, 128), dtype=jnp.float32)
    neg2 = jax.random.normal(k4, (13, 128), dtype=jnp.float32)
    loss = triplet_margin_loss_multi_prev(pos1, pos2, neg1, neg2)
    jax.block_until_ready(loss)
    ref = _reference(pos1, pos2, neg1, neg2)
    assert jnp.allclose(loss, ref, atol=1e-5, rtol=1e-5), (loss, ref)

    print("KERNEL_OK")
</pallas_src>

<mosaic_0001>
module attributes {stable_mosaic.version = 11 : i64} {
  func.func @kernel(%arg0: i32, %arg1: memref<8x32xf32, #tpu.memory_space<vmem>>, %arg2: memref<8x32xf32, #tpu.memory_space<vmem>>, %arg3: memref<8x32xf32, #tpu.memory_space<vmem>>, %arg4: memref<8x32xf32, #tpu.memory_space<vmem>>, %arg5: memref<1x1xf32, #tpu.memory_space<vmem>>) attributes {dimension_semantics = [#tpu.dimension_semantics<parallel>], iteration_bounds = array<i64: 1>, scalar_prefetch = 0 : i64, scratch_operands = 0 : i64, tpu.core_type = #tpu.core_type<tc>, window_params = [{transform_indices = @transform_0, window_bounds = array<i64: 8, 32>}, {transform_indices = @transform_1, window_bounds = array<i64: 8, 32>}, {transform_indices = @transform_2, window_bounds = array<i64: 8, 32>}, {transform_indices = @transform_3, window_bounds = array<i64: 8, 32>}, {transform_indices = @transform_4, window_bounds = array<i64: 1, 1>}]} {
    %c0 = arith.constant 0 : index
    %c0_0 = arith.constant 0 : index
    %0 = vector.load %arg1[%c0, %c0_0] : memref<8x32xf32, #tpu.memory_space<vmem>>, vector<8x32xf32>
    %c0_1 = arith.constant 0 : index
    %c0_2 = arith.constant 0 : index
    %1 = vector.load %arg2[%c0_1, %c0_2] : memref<8x32xf32, #tpu.memory_space<vmem>>, vector<8x32xf32>
    %c0_3 = arith.constant 0 : index
    %c0_4 = arith.constant 0 : index
    %2 = vector.load %arg3[%c0_3, %c0_4] : memref<8x32xf32, #tpu.memory_space<vmem>>, vector<8x32xf32>
    %c0_5 = arith.constant 0 : index
    %c0_6 = arith.constant 0 : index
    %3 = vector.load %arg4[%c0_5, %c0_6] : memref<8x32xf32, #tpu.memory_space<vmem>>, vector<8x32xf32>
    %4 = arith.mulf %0, %0 : vector<8x32xf32>
    %cst = arith.constant dense<0.000000e+00> : vector<8xf32>
    %5 = vector.multi_reduction <add>, %4, %cst [1] : vector<8x32xf32> to vector<8xf32>
    %6 = vector.shape_cast %5 : vector<8xf32> to vector<8x1xf32>
    %7 = arith.mulf %1, %1 : vector<8x32xf32>
    %cst_7 = arith.constant dense<0.000000e+00> : vector<8xf32>
    %8 = vector.multi_reduction <add>, %7, %cst_7 [1] : vector<8x32xf32> to vector<8xf32>
    %9 = vector.shape_cast %8 : vector<8xf32> to vector<8x1xf32>
    %10 = arith.mulf %2, %2 : vector<8x32xf32>
    %cst_8 = arith.constant dense<0.000000e+00> : vector<8xf32>
    %11 = vector.multi_reduction <add>, %10, %cst_8 [1] : vector<8x32xf32> to vector<8xf32>
    %12 = vector.shape_cast %11 : vector<8xf32> to vector<8x1xf32>
    %13 = arith.mulf %3, %3 : vector<8x32xf32>
    %cst_9 = arith.constant dense<0.000000e+00> : vector<8xf32>
    %14 = vector.multi_reduction <add>, %13, %cst_9 [1] : vector<8x32xf32> to vector<8xf32>
    %15 = vector.shape_cast %14 : vector<8xf32> to vector<8x1xf32>
    %16 = arith.mulf %0, %1 : vector<8x32xf32>
    %cst_10 = arith.constant dense<0.000000e+00> : vector<8xf32>
    %17 = vector.multi_reduction <add>, %16, %cst_10 [1] : vector<8x32xf32> to vector<8xf32>
    %18 = vector.shape_cast %17 : vector<8xf32> to vector<8x1xf32>
    %19 = arith.mulf %0, %3 : vector<8x32xf32>
    %cst_11 = arith.constant dense<0.000000e+00> : vector<8xf32>
    %20 = vector.multi_reduction <add>, %19, %cst_11 [1] : vector<8x32xf32> to vector<8xf32>
    %21 = vector.shape_cast %20 : vector<8xf32> to vector<8x1xf32>
    %22 = arith.mulf %1, %2 : vector<8x32xf32>
    %cst_12 = arith.constant dense<0.000000e+00> : vector<8xf32>
    %23 = vector.multi_reduction <add>, %22, %cst_12 [1] : vector<8x32xf32> to vector<8xf32>
    %24 = vector.shape_cast %23 : vector<8xf32> to vector<8x1xf32>
    %25 = math.sqrt %6 : vector<8x1xf32>
    %26 = math.sqrt %9 : vector<8x1xf32>
    %27 = math.sqrt %12 : vector<8x1xf32>
    %28 = math.sqrt %15 : vector<8x1xf32>
    %29 = arith.mulf %25, %26 : vector<8x1xf32>
    %cst_13 = arith.constant 9.99999974E-6 : f32
    %30 = vector.broadcast %cst_13 : f32 to vector<8x1xf32>
    %31 = arith.addf %29, %30 : vector<8x1xf32>
    %32 = tpu.reciprocal %31 : vector<8x1xf32> -> vector<8x1xf32>
    %33 = arith.mulf %18, %32 : vector<8x1xf32>
    %34 = arith.mulf %25, %28 : vector<8x1xf32>
    %cst_14 = arith.constant 9.99999974E-6 : f32
    %35 = vector.broadcast %cst_14 : f32 to vector<8x1xf32>
    %36 = arith.addf %34, %35 : vector<8x1xf32>
    %37 = tpu.reciprocal %36 : vector<8x1xf32> -> vector<8x1xf32>
    %38 = arith.mulf %21, %37 : vector<8x1xf32>
    %39 = arith.mulf %26, %27 : vector<8x1xf32>
    %cst_15 = arith.constant 9.99999974E-6 : f32
    %40 = vector.broadcast %cst_15 : f32 to vector<8x1xf32>
    %41 = arith.addf %39, %40 : vector<8x1xf32>
    %42 = tpu.reciprocal %41 : vector<8x1xf32> -> vector<8x1xf32>
    %43 = arith.mulf %24, %42 : vector<8x1xf32>
    %44 = arith.maximumf %38, %43 : vector<8x1xf32>
    %45 = arith.subf %44, %33 : vector<8x1xf32>
    %cst_16 = arith.constant 2.500000e-01 : f32
    %46 = vector.broadcast %cst_16 : f32 to vector<8x1xf32>
    %47 = arith.addf %45, %46 : vector<8x1xf32>
    %cst_17 = arith.constant 0.000000e+00 : f32
    %48 = vector.broadcast %cst_17 : f32 to vector<8x1xf32>
    %49 = arith.maximumf %47, %48 : vector<8x1xf32>
    %c8_i32 = arith.constant 8 : i32
    %50 = arith.muli %arg0, %c8_i32 : i32
    %51 = tpu.iota {dimensions = array<i32: 0>} : vector<8x1xi32>
    %52 = vector.broadcast %50 : i32 to vector<8x1xi32>
    %53 = arith.addi %52, %51 : vector<8x1xi32>
    %c8_i32_18 = arith.constant 8 : i32
    %54 = vector.broadcast %c8_i32_18 : i32 to vector<8x1xi32>
    %55 = arith.cmpi slt, %53, %54 : vector<8x1xi32>
    %cst_19 = arith.constant 0.000000e+00 : f32
    %56 = vector.broadcast %cst_19 : f32 to vector<8x1xf32>
    %57 = arith.select %55, %49, %56 : vector<8x1xi1>, vector<8x1xf32>
    %cst_20 = arith.constant dense<0.000000e+00> : vector<1xf32>
    %58 = vector.multi_reduction <add>, %57, %cst_20 [0] : vector<8x1xf32> to vector<1xf32>
    %59 = vector.shape_cast %58 : vector<1xf32> to vector<1x1xf32>
    %c0_21 = arith.constant 0 : index
    %c0_22 = arith.constant 0 : index
    %60 = vector.load %arg5[%c0_21, %c0_22] : memref<1x1xf32, #tpu.memory_space<vmem>>, vector<1x1xf32>
    tpu.vector_store %arg5[%c0_21, %c0_22], %59 {strides = array<i32>} : memref<1x1xf32, #tpu.memory_space<vmem>>, vector<1x1xf32>,
    return
  }
  func.func @transform_0(%arg0: i32) -> (i32, i32) {
    %c0_i32 = arith.constant 0 : i32
    %c0_i32_0 = arith.constant 0 : i32
    return %arg0, %c0_i32 : i32, i32
  }
  func.func @transform_1(%arg0: i32) -> (i32, i32) {
    %c0_i32 = arith.constant 0 : i32
    %c0_i32_0 = arith.constant 0 : i32
    return %arg0, %c0_i32 : i32, i32
  }
  func.func @transform_2(%arg0: i32) -> (i32, i32) {
    %c0_i32 = arith.constant 0 : i32
    %c0_i32_0 = arith.constant 0 : i32
    return %arg0, %c0_i32 : i32, i32
  }
  func.func @transform_3(%arg0: i32) -> (i32, i32) {
    %c0_i32 = arith.constant 0 : i32
    %c0_i32_0 = arith.constant 0 : i32
    return %arg0, %c0_i32 : i32, i32
  }
  func.func @transform_4(%arg0: i32) -> (i32, i32) {
    %c0_i32 = arith.constant 0 : i32
    %c0_i32_0 = arith.constant 0 : i32
    return %arg0, %c0_i32 : i32, i32
  }
}

</mosaic_0001>

<llo_original>
// kernel: tpu_custom_call.1
$region0: #{tpu_custom_call.1}
  #allocation0 [shape = 'u32[]', space=smem, size = 0x4, offset = 0x4, fixed_abs, tag = 'smem constant byte address 0x4 - core index']
  #allocation1 [shape = 'u32[72,128]{1,0:T(1,128)}', space=vmem, size = 0x9000, scoped, tag = 'internal scratch']
  %s0 = inlined_call_operand.hbm [shape: f32[8,32], index: 0, kind: input, shape index: {}]
  %s1 = inlined_call_operand.hbm [shape: f32[8,32], index: 1, kind: input, shape index: {}]
  %s2 = inlined_call_operand.hbm [shape: f32[8,32], index: 2, kind: input, shape index: {}]
  %s3 = inlined_call_operand.hbm [shape: f32[8,32], index: 3, kind: input, shape index: {}]
  %s4 = inlined_call_operand.hbm [shape: f32[1,1], index: 4, kind: output, shape index: {}]
  %s5 = sld [smem:[#allocation0]]
  $region42: #{tpu_custom_call.1} parent=0
    _
  %s7 = ssub.s32 1, %s5
  %s8 = scalar_select 0, %s7, %s5
  $region1: #{tpu_custom_call.1} parent=0
    #allocation2 [shape = 'u8[4096]{0}', space=vmem, size = 0x1000, scoped, tag = 'input window, operand 0, single buffered']
    #allocation3 [shape = 's32[1]{0}', space=sflag, size = 0x4, scoped, tag = 'scoped memory for tpu_custom_call.1']
    #allocation4 [shape = 's32[1]{0}', space=sflag, size = 0x4, scoped, tag = 'scoped memory for tpu_custom_call.1']
    #allocation5 [shape = 'u8[4096]{0}', space=vmem, size = 0x1000, scoped, tag = 'input window, operand 1, single buffered']
    #allocation6 [shape = 's32[1]{0}', space=sflag, size = 0x4, scoped, tag = 'scoped memory for tpu_custom_call.1']
    #allocation7 [shape = 'u8[4096]{0}', space=vmem, size = 0x1000, scoped, tag = 'input window, operand 2, single buffered']
    #allocation8 [shape = 'u8[4096]{0}', space=vmem, size = 0x1000, scoped, tag = 'input window, operand 3, single buffered']
    #allocation9 [shape = 's32[1]{0}', space=sflag, size = 0x4, scoped, tag = 'scoped memory for tpu_custom_call.1']
    #allocation10 [shape = 'u8[512]{0}', space=vmem, size = 0x400, scoped, tag = 'output window, operand 0, single buffered']
    %9 = vsyncpa [#allocation3], 0
    %10 = vsyncpa [#allocation6], 0
    %11 = vsyncpa [#allocation9], 0
    %12 = vsyncpa [#allocation4], 0
    // Predicated region
    $region2: #{tpu_custom_call.1} parent=1 // pred_check
      _
    $region3: #{tpu_custom_call.1} parent=1 // pred_check_branch
      %14 = sbr.rel (0) target = $region5
    $region4: #{tpu_custom_call.1} parent=1 // pred_region
      %16 = vsyncadd [#allocation3], 0
      %s18 = sshll.u32 %s0, 4
      %s19 = int_to_ptr.hbm [resolvable:$true] %s18
      %s20 = sshll.u32 [#allocation2], 4
      %s21 = int_to_ptr.vmem [resolvable:$true] %s20
      %23 = dma.hbm_to_vmem [thread:$0]  %s19, 128, %s21, [#allocation3]
    $region5: #{tpu_custom_call.1} parent=1 // pred_fallthru
      _
    // Predicated region
    $region6: #{tpu_custom_call.1} parent=1 // pred_check
      _
    $region7: #{tpu_custom_call.1} parent=1 // pred_check_branch
      %25 = sbr.rel (0) target = $region9
    $region8: #{tpu_custom_call.1} parent=1 // pred_region
      %27 = vsyncadd [#allocation6], 0
      %s29 = sshll.u32 %s1, 4
      %s30 = int_to_ptr.hbm [resolvable:$true] %s29
      %s31 = sshll.u32 [#allocation5], 4
      %s32 = int_to_ptr.vmem [resolvable:$true] %s31
      %34 = dma.hbm_to_vmem [thread:$0]  %s30, 128, %s32, [#allocation6]
    $region9: #{tpu_custom_call.1} parent=1 // pred_fallthru
      _
    // Predicated region
    $region10: #{tpu_custom_call.1} parent=1 // pred_check
      _
    $region11: #{tpu_custom_call.1} parent=1 // pred_check_branch
      %36 = sbr.rel (0) target = $region13
    $region12: #{tpu_custom_call.1} parent=1 // pred_region
      %38 = vsyncadd [#allocation6], 0
      %s40 = sshll.u32 %s2, 4
      %s41 = int_to_ptr.hbm [resolvable:$true] %s40
      %s42 = sshll.u32 [#allocation7], 4
      %s43 = int_to_ptr.vmem [resolvable:$true] %s42
      %45 = dma.hbm_to_vmem [thread:$0]  %s41, 128, %s43, [#allocation6]
    $region13: #{tpu_custom_call.1} parent=1 // pred_fallthru
      _
    // Predicated region
    $region14: #{tpu_custom_call.1} parent=1 // pred_check
      _
    $region15: #{tpu_custom_call.1} parent=1 // pred_check_branch
      %47 = sbr.rel (0) target = $region17
    $region16: #{tpu_custom_call.1} parent=1 // pred_region
      %49 = vsyncadd [#allocation9], 0
      %s51 = sshll.u32 %s3, 4
      %s52 = int_to_ptr.hbm [resolvable:$true] %s51
      %s53 = sshll.u32 [#allocation8], 4
      %s54 = int_to_ptr.vmem [resolvable:$true] %s53
      %56 = dma.hbm_to_vmem [thread:$0]  %s52, 128, %s54, [#allocation9]
    $region17: #{tpu_custom_call.1} parent=1 // pred_fallthru
      _
    // Predicated region
    $region18: #{tpu_custom_call.1} parent=1 // pred_check
      _
    $region19: #{tpu_custom_call.1} parent=1 // pred_check_branch
      %58 = sbr.rel (0) target = $region21
    $region20: #{tpu_custom_call.1} parent=1 // pred_region
      %60 = dma.done [#allocation3], 128
    $region21: #{tpu_custom_call.1} parent=1 // pred_fallthru
      _
    // Predicated region
    $region22: #{tpu_custom_call.1} parent=1 // pred_check
      _
    $region23: #{tpu_custom_call.1} parent=1 // pred_check_branch
      %62 = sbr.rel (0) target = $region25
    $region24: #{tpu_custom_call.1} parent=1 // pred_region
      %64 = dma.done [#allocation6], 128
    $region25: #{tpu_custom_call.1} parent=1 // pred_fallthru
      _
    // Predicated region
    $region26: #{tpu_custom_call.1} parent=1 // pred_check
      _
    $region27: #{tpu_custom_call.1} parent=1 // pred_check_branch
      %66 = sbr.rel (0) target = $region29
    $region28: #{tpu_custom_call.1} parent=1 // pred_region
      %68 = dma.done [#allocation6], 128
    $region29: #{tpu_custom_call.1} parent=1 // pred_fallthru
      _
    // Predicated region
    $region30: #{tpu_custom_call.1} parent=1 // pred_check
      _
    $region31: #{tpu_custom_call.1} parent=1 // pred_check_branch
      %70 = sbr.rel (0) target = $region33
    $region32: #{tpu_custom_call.1} parent=1 // pred_region
      %72 = dma.done [#allocation9], 128
    $region33: #{tpu_custom_call.1} parent=1 // pred_fallthru
      _
    %v73 = vld [vmem:[#allocation2] sm:$0xff]
    %v74 = vld [vmem:[#allocation5] sm:$0xff]
    %v75 = vld [vmem:[#allocation7] sm:$0xff]
    %v76 = vld [vmem:[#allocation8] sm:$0xff]
    %v77 = vmul.f32 %v73, %v73
    %vm78 = vcmask 261120
    %v79 = vsel %vm78, %v77, 0.0
    %80 = vadd.xlane.f32.xlu0 %v79
    %v81 = vpop.xlane.xlu0 %80
    %v82 = vmul.f32 %v74, %v74
    %v83 = vsel %vm78, %v82, 0.0
    %84 = vadd.xlane.f32.xlu0 %v83
    %v85 = vpop.xlane.xlu0 %84
    %v86 = vmul.f32 %v75, %v75
    %v87 = vsel %vm78, %v86, 0.0
    %88 = vadd.xlane.f32.xlu0 %v87
    %v89 = vpop.xlane.xlu0 %88
    %v90 = vmul.f32 %v76, %v76
    %v91 = vsel %vm78, %v90, 0.0
    %92 = vadd.xlane.f32.xlu0 %v91
    %v93 = vpop.xlane.xlu0 %92
    %v94 = vmul.f32 %v73, %v74
    %v95 = vsel %vm78, %v94, 0.0
    %96 = vadd.xlane.f32.xlu0 %v95
    %v97 = vpop.xlane.xlu0 %96
    %v98 = vmul.f32 %v73, %v76
    %v99 = vsel %vm78, %v98, 0.0
    %100 = vadd.xlane.f32.xlu0 %v99
    %v101 = vpop.xlane.xlu0 %100
    %v102 = vmul.f32 %v74, %v75
    %v103 = vsel %vm78, %v102, 0.0
    %104 = vadd.xlane.f32.xlu0 %v103
    %v105 = vpop.xlane.xlu0 %104
    %v106 = vrsqrt.pop %v81
    %v107 = vmul.f32 %v106, %v81
    %v108 = vmul.f32 %v107, %v106
    %v109 = vmul.f32 0.5, %v108
    %v110 = vsub.f32 1.5, %v109
    %v111 = vmul.f32 %v106, %v110
    %v112 = vmul.f32 %v81, %v111
    %vm113 = vcmp.eq.f32.partialorder %v81, inf
    %v114 = vsel %vm113, %v81, %v112
    %vm115 = vcmp.eq.f32.partialorder %v81, 0.0
    %v116 = vand.u32 %v81, 2147483648
    %v117 = vsel %vm115, %v116, %v114
    %v118 = vrsqrt.pop %v85
    %v119 = vmul.f32 %v118, %v85
    %v120 = vmul.f32 %v119, %v118
    %v121 = vmul.f32 0.5, %v120
    %v122 = vsub.f32 1.5, %v121
    %v123 = vmul.f32 %v118, %v122
    %v124 = vmul.f32 %v85, %v123
    %vm125 = vcmp.eq.f32.partialorder %v85, inf
    %v126 = vsel %vm125, %v85, %v124
    %vm127 = vcmp.eq.f32.partialorder %v85, 0.0
    %v128 = vand.u32 %v85, 2147483648
    %v129 = vsel %vm127, %v128, %v126
    %v130 = vrsqrt.pop %v89
    %v131 = vmul.f32 %v130, %v89
    %v132 = vmul.f32 %v131, %v130
    %v133 = vmul.f32 0.5, %v132
    %v134 = vsub.f32 1.5, %v133
    %v135 = vmul.f32 %v130, %v134
    %v136 = vmul.f32 %v89, %v135
    %vm137 = vcmp.eq.f32.partialorder %v89, inf
    %v138 = vsel %vm137, %v89, %v136
    %vm139 = vcmp.eq.f32.partialorder %v89, 0.0
    %v140 = vand.u32 %v89, 2147483648
    %v141 = vsel %vm139, %v140, %v138
    %v142 = vrsqrt.pop %v93
    %v143 = vmul.f32 %v142, %v93
    %v144 = vmul.f32 %v143, %v142
    %v145 = vmul.f32 0.5, %v144
    %v146 = vsub.f32 1.5, %v145
    %v147 = vmul.f32 %v142, %v146
    %v148 = vmul.f32 %v93, %v147
    %vm149 = vcmp.eq.f32.partialorder %v93, inf
    %v150 = vsel %vm149, %v93, %v148
    %vm151 = vcmp.eq.f32.partialorder %v93, 0.0
    %v152 = vand.u32 %v93, 2147483648
    %v153 = vsel %vm151, %v152, %v150
    %v154 = vmul.f32 %v117, %v129
    %v155 = vadd.f32 %v154, 1e-05
    %v156 = vrcp.pop %v155
    %v157 = vmul.f32 %v155, %v156
    %v158 = vsub.f32 1.0, %v157
    %v159 = vmul.f32 %v156, %v158
    %v160 = vadd.f32 %v156, %v159
    %vm161 = vweird.f32 %v155
    %vm162 = vweird.f32 %v156
    %vm163 = vmor %vm161, %vm162
    %v164 = vsel %vm163, %v156, %v160
    %v165 = vand.u32 2147483647, %v155
    %vm166 = vcmp.eq.f32.partialorder %v165, 8.507059e+37
    %v167 = vand.u32 %v155, 2147483648
    %v168 = vor.u32 1.1754944e-38, %v167
    %v169 = vsel %vm166, %v168, %v164
    %v170 = vmul.f32 %v97, %v169
    %v171 = vmul.f32 %v117, %v153
    %v172 = vadd.f32 %v171, 1e-05
    %v173 = vrcp.pop %v172
    %v174 = vmul.f32 %v172, %v173
    %v175 = vsub.f32 1.0, %v174
    %v176 = vmul.f32 %v173, %v175
    %v177 = vadd.f32 %v173, %v176
    %vm178 = vweird.f32 %v172
    %vm179 = vweird.f32 %v173
    %vm180 = vmor %vm178, %vm179
    %v181 = vsel %vm180, %v173, %v177
    %v182 = vand.u32 2147483647, %v172
    %vm183 = vcmp.eq.f32.partialorder %v182, 8.507059e+37
    %v184 = vand.u32 %v172, 2147483648
    %v185 = vor.u32 1.1754944e-38, %v184
    %v186 = vsel %vm183, %v185, %v181
    %v187 = vmul.f32 %v101, %v186
    %v188 = vmul.f32 %v129, %v141
    %v189 = vadd.f32 %v188, 1e-05
    %v190 = vrcp.pop %v189
    %v191 = vmul.f32 %v189, %v190
    %v192 = vsub.f32 1.0, %v191
    %v193 = vmul.f32 %v190, %v192
    %v194 = vadd.f32 %v190, %v193
    %vm195 = vweird.f32 %v189
    %vm196 = vweird.f32 %v190
    %vm197 = vmor %vm195, %vm196
    %v198 = vsel %vm197, %v190, %v194
    %v199 = vand.u32 2147483647, %v189
    %vm200 = vcmp.eq.f32.partialorder %v199, 8.507059e+37
    %v201 = vand.u32 %v189, 2147483648
    %v202 = vor.u32 1.1754944e-38, %v201
    %v203 = vsel %vm200, %v202, %v198
    %v204 = vmul.f32 %v105, %v203
    %v205 = vmax.f32 %v187, %v204
    %v206 = vsub.f32 %v205, %v170
    %v207 = vadd.f32 %v206, 0.25
    %v208 = vmax.f32 %v207, 0.0
    %s209 = smul.u32 0, 8
    %v210 = vlaneseq
    %v211 = vshrl.u32 %v210, 7
    %v212 = vstv %s209
    %v213 = vadd.s32 %v212, %v211
    %vm214 = vcmp.lt.s32.totalorder %v213, 8
    %v215 = vsel %vm214, %v208, 0.0
    %v216 = vrot.slane %v215, 4
    %v217 = vadd.f32 %v215, %v216
    %v218 = vrot.slane %v217, 2
    %v219 = vadd.f32 %v217, %v218
    %v220 = vrot.slane %v219, 1
    %v221 = vadd.f32 %v219, %v220
    %vm222 = vcmask 0
    %223 = vst.msk [vmem:[#allocation10] sm:$0x1] %vm222, %v221
    // Predicated region
    $region34: #{tpu_custom_call.1} parent=1 // pred_check
      _
    $region35: #{tpu_custom_call.1} parent=1 // pred_check_branch
      %225 = sbr.rel (0) target = $region37
    $region36: #{tpu_custom_call.1} parent=1 // pred_region
      %227 = vsyncadd [#allocation4], 0
      %s229 = sshll.u32 [#allocation10], 4
      %s230 = int_to_ptr.vmem [resolvable:$true] %s229
      %s231 = sshll.u32 %s4, 4
      %s232 = int_to_ptr.hbm [resolvable:$true] %s231
      %234 = dma.vmem_to_hbm [thread:$0]  %s230, 16, %s232, [#allocation4]
    $region37: #{tpu_custom_call.1} parent=1 // pred_fallthru
      _
    // Predicated region
    $region38: #{tpu_custom_call.1} parent=1 // pred_check
      _
    $region39: #{tpu_custom_call.1} parent=1 // pred_check_branch
      %236 = sbr.rel (0) target = $region41
    $region40: #{tpu_custom_call.1} parent=1 // pred_region
      %238 = dma.done [#allocation4], 16
    $region41: #{tpu_custom_call.1} parent=1 // pred_fallthru
      _
    %239 = vsyncpa [#allocation3], 1
    %240 = vsyncpa [#allocation6], 1
    %241 = vsyncpa [#allocation9], 1
    %242 = vsyncpa [#allocation4], 1

</llo_original>
